<compile_context>
chip_gen: v7x
topology: tpu7x:2x2x1
jax: 0.10.0
libtpu: 0.0.40
codegen_flags: <defaults>
</compile_context>

<pallas_src>
import functools

import jax
import jax.numpy as jnp
from jax.experimental import pallas as pl
from jax.experimental.pallas import tpu as pltpu


def _round_up(x, m):
    return (x + m - 1) // m * m


def _mlp_kernel(x_ref, w1_ref, b1_ref, w2_ref, b2_ref, w3_ref, b3_ref,
                w4_ref, b4_ref, o_ref):
    """Whole 4-layer MLP for one batch tile, entirely in VMEM.

    Weights may be bf16 (MXU fast path on all generations) or f32; matmuls
    always accumulate in f32 and the bias-add / ReLU post-ops are f32 (VPU-
    safe on v5e, which has no bf16 VPU/EUP).
    """
    cdt = w1_ref.dtype                        # MXU operand dtype

    x = x_ref[...].astype(cdt)
    h = jnp.dot(x, w1_ref[...], preferred_element_type=jnp.float32) + b1_ref[...]
    h = jnp.maximum(h, 0.0).astype(cdt)

    h = jnp.dot(h, w2_ref[...], preferred_element_type=jnp.float32) + b2_ref[...]
    h = jnp.maximum(h, 0.0).astype(cdt)

    h = jnp.dot(h, w3_ref[...], preferred_element_type=jnp.float32) + b3_ref[...]
    h = jnp.maximum(h, 0.0).astype(cdt)

    out = jnp.dot(h, w4_ref[...], preferred_element_type=jnp.float32) + b4_ref[...]
    o_ref[...] = out.astype(o_ref.dtype)


def _choose_block_b(B):
    """Batch tile: 1 tile for tiny B, 2 tiles for mid B (v7x megacore),
    1024-row tiles for large B (amortize per-step pipeline overhead)."""
    if B <= 128:
        return _round_up(B, 8)
    if B < 2048:
        return _round_up((B + 1) // 2, 8)
    return 1024


def prepare_params(params, use_bf16=False):
    """One-time parameter preprocessing (call once, NOT per forward step).

    Casts weights to the MXU operand dtype; biases stay f32 because they are
    added to the f32 accumulator inside the kernel.
    """
    w1, b1, w2, b2, w3, b3, w4, b4 = params
    cdt = jnp.bfloat16 if use_bf16 else jnp.float32
    return (w1.astype(cdt), b1.astype(jnp.float32),
            w2.astype(cdt), b2.astype(jnp.float32),
            w3.astype(cdt), b3.astype(jnp.float32),
            w4.astype(cdt), b4.astype(jnp.float32))


@functools.partial(jax.jit, static_argnames=("block_b",))
def highway_mlp_forward(x, params, block_b=None):
    """x: any shape (B, ...); flattened to (B, state_dim) like torch's x.view(B, -1).

    `params` should come from prepare_params() so no per-call casting happens.
    """
    B = x.shape[0]
    x2 = x.reshape(B, -1).astype(jnp.float32)   # glue: torch's .view(B, -1)
    state_dim = x2.shape[1]
    w1, b1, w2, b2, w3, b3, w4, b4 = params
    n_actions = w4.shape[1]

    if block_b is None:
        block_b = _choose_block_b(B)
    assert block_b % 8 == 0, "block_b must be a multiple of 8 (f32 sublane)"

    grid = (pl.cdiv(B, block_b),)
    const = lambda i: (0, 0)          # grid-invariant blocks stay VMEM-resident

    # Advisory cost estimate so XLA schedules this small custom call sensibly.
    flops = 2 * B * (state_dim * 128 + 128 * 256 + 256 * 128 + 128 * n_actions)
    weight_bytes = sum(int(p.size) * p.dtype.itemsize
                       for p in (w1, b1, w2, b2, w3, b3, w4, b4))
    bytes_accessed = B * state_dim * 4 + B * n_actions * 4 + weight_bytes
    cost = pl.CostEstimate(flops=flops, transcendentals=0,
                           bytes_accessed=bytes_accessed)

    out = pl.pallas_call(
        _mlp_kernel,
        out_shape=jax.ShapeDtypeStruct((B, n_actions), jnp.float32),
        grid_spec=pl.GridSpec(
            grid=grid,
            in_specs=[
                # x tile: last block dim == full array dim (no lane padding).
                pl.BlockSpec((block_b, state_dim), lambda i: (i, 0)),
                pl.BlockSpec(w1.shape, const),
                pl.BlockSpec(b1.shape, const),
                pl.BlockSpec(w2.shape, const),
                pl.BlockSpec(b2.shape, const),
                pl.BlockSpec(w3.shape, const),
                pl.BlockSpec(b3.shape, const),
                pl.BlockSpec(w4.shape, const),
                pl.BlockSpec(b4.shape, const),
            ],
            # Output block: full-width last dim == n_actions (no padded lanes,
            # no wrapper slice); ragged last batch tile handled by Pallas.
            out_specs=pl.BlockSpec((block_b, n_actions), lambda i: (i, 0)),
        ),
        compiler_params=pltpu.CompilerParams(
            dimension_semantics=("parallel",)),
        cost_estimate=cost,
    )(x2, w1, b1, w2, b2, w3, b3, w4, b4)

    return out


def init_params(key, state_dim, n_actions):
    """Deterministic init mimicking torch.nn.Linear (uniform +-1/sqrt(fan_in)).

    Weights stored as (in_features, out_features); biases as (1, out_features)."""
    dims = [(state_dim, 128), (128, 256), (256, 128), (128, n_actions)]
    params = []
    for (fan_in, fan_out) in dims:
        key, kw, kb = jax.random.split(key, 3)
        bound = 1.0 / jnp.sqrt(jnp.float32(fan_in))
        w = jax.random.uniform(kw, (fan_in, fan_out), jnp.float32, -bound, bound)
        b = jax.random.uniform(kb, (1, fan_out), jnp.float32, -bound, bound)
        params += [w, b]
    return tuple(params)


def reference_forward(x, params):
    """Pure-JAX f32 reference for correctness checking."""
    B = x.shape[0]
    h = x.reshape(B, -1)
    w1, b1, w2, b2, w3, b3, w4, b4 = params
    h = jnp.maximum(h @ w1 + b1, 0.0)
    h = jnp.maximum(h @ w2 + b2, 0.0)
    h = jnp.maximum(h @ w3 + b3, 0.0)
    return h @ w4 + b4


if __name__ == "__main__":
    key = jax.random.PRNGKey(0)
    k_x, k_p, k_x2 = jax.random.split(key, 3)

    # Small "highway"-style observation: (B, 8, 8) -> state_dim = 64.
    B, H, W = 8, 8, 8
    state_dim = H * W
    n_actions = 5

    params = init_params(k_p, state_dim, n_actions)

    # 1) f32 path, tiny batch: one 8-row tile, single grid step.
    p_f32 = prepare_params(params, use_bf16=False)
    x = jax.random.normal(k_x, (B, H, W), jnp.float32)
    out = jax.block_until_ready(highway_mlp_forward(x, p_f32))
    ref = reference_forward(x, params)
    assert out.shape == (B, n_actions)
    assert jnp.allclose(out, ref, atol=1e-4, rtol=1e-4), "f32 mismatch vs reference"

    # 2) bf16-weight path, mid batch with a ragged last tile: block_b = 152,
    #    grid = 2 "parallel" steps (both v7x TensorCores get work), f32 accum.
    p_bf16 = prepare_params(params, use_bf16=True)
    B2 = 300
    x_big = jax.random.normal(k_x2, (B2, H, W), jnp.float32)
    out_big = jax.block_until_ready(highway_mlp_forward(x_big, p_bf16))
    ref_big = reference_forward(x_big, params)
    assert out_big.shape == (B2, n_actions)
    assert jnp.allclose(out_big, ref_big, atol=1e-1, rtol=2e-2), \
        "bf16 mismatch vs reference"

    print("KERNEL_OK")
</pallas_src>

<mosaic_0001>
module attributes {stable_mosaic.version = 11 : i64} {
  func.func @_mlp_kernel(%arg0: i32, %arg1: memref<8x64xf32, #tpu.memory_space<vmem>>, %arg2: memref<64x128xf32, #tpu.memory_space<vmem>>, %arg3: memref<1x128xf32, #tpu.memory_space<vmem>>, %arg4: memref<128x256xf32, #tpu.memory_space<vmem>>, %arg5: memref<1x256xf32, #tpu.memory_space<vmem>>, %arg6: memref<256x128xf32, #tpu.memory_space<vmem>>, %arg7: memref<1x128xf32, #tpu.memory_space<vmem>>, %arg8: memref<128x5xf32, #tpu.memory_space<vmem>>, %arg9: memref<1x5xf32, #tpu.memory_space<vmem>>, %arg10: memref<8x5xf32, #tpu.memory_space<vmem>>) attributes {dimension_semantics = [#tpu.dimension_semantics<parallel>], iteration_bounds = array<i64: 1>, scalar_prefetch = 0 : i64, scratch_operands = 0 : i64, tpu.core_type = #tpu.core_type<tc>, window_params = [{transform_indices = @transform_0, window_bounds = array<i64: 8, 64>}, {pipeline_mode = #tpu.pipeline_mode<synchronous>, transform_indices = @transform_1, window_bounds = array<i64: 64, 128>}, {pipeline_mode = #tpu.pipeline_mode<synchronous>, transform_indices = @transform_2, window_bounds = array<i64: 1, 128>}, {pipeline_mode = #tpu.pipeline_mode<synchronous>, transform_indices = @transform_3, window_bounds = array<i64: 128, 256>}, {pipeline_mode = #tpu.pipeline_mode<synchronous>, transform_indices = @transform_4, window_bounds = array<i64: 1, 256>}, {pipeline_mode = #tpu.pipeline_mode<synchronous>, transform_indices = @transform_5, window_bounds = array<i64: 256, 128>}, {pipeline_mode = #tpu.pipeline_mode<synchronous>, transform_indices = @transform_6, window_bounds = array<i64: 1, 128>}, {pipeline_mode = #tpu.pipeline_mode<synchronous>, transform_indices = @transform_7, window_bounds = array<i64: 128, 5>}, {pipeline_mode = #tpu.pipeline_mode<synchronous>, transform_indices = @transform_8, window_bounds = array<i64: 1, 5>}, {transform_indices = @transform_9, window_bounds = array<i64: 8, 5>}]} {
    %c0 = arith.constant 0 : index
    %c0_0 = arith.constant 0 : index
    %0 = vector.load %arg1[%c0, %c0_0] : memref<8x64xf32, #tpu.memory_space<vmem>>, vector<8x64xf32>
    %c0_1 = arith.constant 0 : index
    %c0_2 = arith.constant 0 : index
    %1 = vector.load %arg2[%c0_1, %c0_2] : memref<64x128xf32, #tpu.memory_space<vmem>>, vector<64x128xf32>
    %cst = arith.constant dense<0.000000e+00> : vector<8x128xf32>
    %2 = tpu.matmul %0, %1, %cst {dimension_numbers = #tpu.dot_dimension_numbers<[1], [0], [0], [1], [0, 0, 1, 1], [], []>} : vector<8x64xf32>, vector<64x128xf32>, vector<8x128xf32> -> vector<8x128xf32>
    %c0_3 = arith.constant 0 : index
    %c0_4 = arith.constant 0 : index
    %3 = vector.load %arg3[%c0_3, %c0_4] : memref<1x128xf32, #tpu.memory_space<vmem>>, vector<1x128xf32>
    %4 = vector.broadcast %3 : vector<1x128xf32> to vector<8x128xf32>
    %5 = arith.addf %2, %4 : vector<8x128xf32>
    %cst_5 = arith.constant 0.000000e+00 : f32
    %6 = vector.broadcast %cst_5 : f32 to vector<8x128xf32>
    %7 = arith.maximumf %5, %6 : vector<8x128xf32>
    %c0_6 = arith.constant 0 : index
    %c0_7 = arith.constant 0 : index
    %8 = vector.load %arg4[%c0_6, %c0_7] : memref<128x256xf32, #tpu.memory_space<vmem>>, vector<128x256xf32>
    %cst_8 = arith.constant dense<0.000000e+00> : vector<8x256xf32>
    %9 = tpu.matmul %7, %8, %cst_8 {dimension_numbers = #tpu.dot_dimension_numbers<[1], [0], [0], [1], [0, 0, 1, 1], [], []>} : vector<8x128xf32>, vector<128x256xf32>, vector<8x256xf32> -> vector<8x256xf32>
    %c0_9 = arith.constant 0 : index
    %c0_10 = arith.constant 0 : index
    %10 = vector.load %arg5[%c0_9, %c0_10] : memref<1x256xf32, #tpu.memory_space<vmem>>, vector<1x256xf32>
    %11 = vector.broadcast %10 : vector<1x256xf32> to vector<8x256xf32>
    %12 = arith.addf %9, %11 : vector<8x256xf32>
    %cst_11 = arith.constant 0.000000e+00 : f32
    %13 = vector.broadcast %cst_11 : f32 to vector<8x256xf32>
    %14 = arith.maximumf %12, %13 : vector<8x256xf32>
    %c0_12 = arith.constant 0 : index
    %c0_13 = arith.constant 0 : index
    %15 = vector.load %arg6[%c0_12, %c0_13] : memref<256x128xf32, #tpu.memory_space<vmem>>, vector<256x128xf32>
    %cst_14 = arith.constant dense<0.000000e+00> : vector<8x128xf32>
    %16 = tpu.matmul %14, %15, %cst_14 {dimension_numbers = #tpu.dot_dimension_numbers<[1], [0], [0], [1], [0, 0, 1, 1], [], []>} : vector<8x256xf32>, vector<256x128xf32>, vector<8x128xf32> -> vector<8x128xf32>
    %c0_15 = arith.constant 0 : index
    %c0_16 = arith.constant 0 : index
    %17 = vector.load %arg7[%c0_15, %c0_16] : memref<1x128xf32, #tpu.memory_space<vmem>>, vector<1x128xf32>
    %18 = vector.broadcast %17 : vector<1x128xf32> to vector<8x128xf32>
    %19 = arith.addf %16, %18 : vector<8x128xf32>
    %cst_17 = arith.constant 0.000000e+00 : f32
    %20 = vector.broadcast %cst_17 : f32 to vector<8x128xf32>
    %21 = arith.maximumf %19, %20 : vector<8x128xf32>
    %c0_18 = arith.constant 0 : index
    %c0_19 = arith.constant 0 : index
    %22 = vector.load %arg8[%c0_18, %c0_19] : memref<128x5xf32, #tpu.memory_space<vmem>>, vector<128x5xf32>
    %cst_20 = arith.constant dense<0.000000e+00> : vector<8x5xf32>
    %23 = tpu.matmul %21, %22, %cst_20 {dimension_numbers = #tpu.dot_dimension_numbers<[1], [0], [0], [1], [0, 0, 1, 1], [], []>} : vector<8x128xf32>, vector<128x5xf32>, vector<8x5xf32> -> vector<8x5xf32>
    %c0_21 = arith.constant 0 : index
    %c0_22 = arith.constant 0 : index
    %24 = vector.load %arg9[%c0_21, %c0_22] : memref<1x5xf32, #tpu.memory_space<vmem>>, vector<1x5xf32>
    %25 = vector.broadcast %24 : vector<1x5xf32> to vector<8x5xf32>
    %26 = arith.addf %23, %25 : vector<8x5xf32>
    %c0_23 = arith.constant 0 : index
    %c0_24 = arith.constant 0 : index
    %27 = vector.load %arg10[%c0_23, %c0_24] : memref<8x5xf32, #tpu.memory_space<vmem>>, vector<8x5xf32>
    tpu.vector_store %arg10[%c0_23, %c0_24], %26 {strides = array<i32>} : memref<8x5xf32, #tpu.memory_space<vmem>>, vector<8x5xf32>,
    return
  }
  func.func @transform_0(%arg0: i32) -> (i32, i32) {
    %c0_i32 = arith.constant 0 : i32
    %c0_i32_0 = arith.constant 0 : i32
    return %arg0, %c0_i32 : i32, i32
  }
  func.func @transform_1(%arg0: i32) -> (i32, i32) {
    %c0_i32 = arith.constant 0 : i32
    %c0_i32_0 = arith.constant 0 : i32
    %c0_i32_1 = arith.constant 0 : i32
    return %c0_i32, %c0_i32_0 : i32, i32
  }
  func.func @transform_2(%arg0: i32) -> (i32, i32) {
    %c0_i32 = arith.constant 0 : i32
    %c0_i32_0 = arith.constant 0 : i32
    %c0_i32_1 = arith.constant 0 : i32
    return %c0_i32, %c0_i32_0 : i32, i32
  }
  func.func @transform_3(%arg0: i32) -> (i32, i32) {
    %c0_i32 = arith.constant 0 : i32
    %c0_i32_0 = arith.constant 0 : i32
    %c0_i32_1 = arith.constant 0 : i32
    return %c0_i32, %c0_i32_0 : i32, i32
  }
  func.func @transform_4(%arg0: i32) -> (i32, i32) {
    %c0_i32 = arith.constant 0 : i32
    %c0_i32_0 = arith.constant 0 : i32
    %c0_i32_1 = arith.constant 0 : i32
    return %c0_i32, %c0_i32_0 : i32, i32
  }
  func.func @transform_5(%arg0: i32) -> (i32, i32) {
    %c0_i32 = arith.constant 0 : i32
    %c0_i32_0 = arith.constant 0 : i32
    %c0_i32_1 = arith.constant 0 : i32
    return %c0_i32, %c0_i32_0 : i32, i32
  }
  func.func @transform_6(%arg0: i32) -> (i32, i32) {
    %c0_i32 = arith.constant 0 : i32
    %c0_i32_0 = arith.constant 0 : i32
    %c0_i32_1 = arith.constant 0 : i32
    return %c0_i32, %c0_i32_0 : i32, i32
  }
  func.func @transform_7(%arg0: i32) -> (i32, i32) {
    %c0_i32 = arith.constant 0 : i32
    %c0_i32_0 = arith.constant 0 : i32
    %c0_i32_1 = arith.constant 0 : i32
    return %c0_i32, %c0_i32_0 : i32, i32
  }
  func.func @transform_8(%arg0: i32) -> (i32, i32) {
    %c0_i32 = arith.constant 0 : i32
    %c0_i32_0 = arith.constant 0 : i32
    %c0_i32_1 = arith.constant 0 : i32
    return %c0_i32, %c0_i32_0 : i32, i32
  }
  func.func @transform_9(%arg0: i32) -> (i32, i32) {
    %c0_i32 = arith.constant 0 : i32
    %c0_i32_0 = arith.constant 0 : i32
    return %arg0, %c0_i32 : i32, i32
  }
}

</mosaic_0001>

<llo_original>
// kernel: highway_mlp_forward.1
$region0: #{highway_mlp_forward.1}
  #allocation0 [shape = 'u32[]', space=smem, size = 0x4, offset = 0x4, fixed_abs, tag = 'smem constant byte address 0x4 - core index']
  #allocation1 [shape = 'u32[144,128]{1,0:T(1,128)}', space=vmem, size = 0x12000, scoped, tag = 'internal scratch']
  %s0 = inlined_call_operand.vmem [shape: f32[8,64], index: 0, kind: input, shape index: {}]
  %s1 = inlined_call_operand.vmem [shape: f32[64,128], index: 1, kind: input, shape index: {}]
  %s2 = inlined_call_operand.vmem [shape: f32[1,128], index: 2, kind: input, shape index: {}]
  %s3 = inlined_call_operand.hbm [shape: f32[128,256], index: 3, kind: input, shape index: {}]
  %s4 = inlined_call_operand.vmem [shape: f32[1,256], index: 4, kind: input, shape index: {}]
  %s5 = inlined_call_operand.hbm [shape: f32[256,128], index: 5, kind: input, shape index: {}]
  %s6 = inlined_call_operand.vmem [shape: f32[1,128], index: 6, kind: input, shape index: {}]
  %s7 = inlined_call_operand.vmem [shape: f32[128,5], index: 7, kind: input, shape index: {}]
  %s8 = inlined_call_operand.vmem [shape: f32[1,5], index: 8, kind: input, shape index: {}]
  %s9 = inlined_call_operand.hbm [shape: f32[8,5], index: 9, kind: output, shape index: {}]
  %s10 = sld [smem:[#allocation0]]
  $region54: #{highway_mlp_forward.1} parent=0
    _
  %s12 = ssub.s32 1, %s10
  %s13 = scalar_select 0, %s12, %s10
  $region1: #{highway_mlp_forward.1} parent=0
    #allocation2 [shape = 'u8[131072]{0}', space=vmem, size = 0x20000, scoped, tag = 'input window, operand 3, single buffered']
    #allocation3 [shape = 's32[1]{0}', space=sflag, size = 0x4, scoped, tag = 'scoped memory for highway_mlp_forward.1']
    #allocation4 [shape = 's32[1]{0}', space=sflag, size = 0x4, scoped, tag = 'scoped memory for highway_mlp_forward.1']
    #allocation5 [shape = 'u8[131072]{0}', space=vmem, size = 0x20000, scoped, tag = 'input window, operand 5, single buffered']
    #allocation6 [shape = 's32[1]{0}', space=sflag, size = 0x4, scoped, tag = 'scoped memory for highway_mlp_forward.1']
    #allocation7 [shape = 'u8[4096]{0}', space=vmem, size = 0x1000, scoped, tag = 'output window, operand 0, single buffered']
    %14 = vsyncpa [#allocation3], 0
    %15 = vsyncpa [#allocation6], 0
    %16 = vsyncpa [#allocation4], 0
    // Predicated region
    $region2: #{highway_mlp_forward.1} parent=1 // pred_check
      _
    $region3: #{highway_mlp_forward.1} parent=1 // pred_check_branch
      %18 = sbr.rel (0) target = $region5
    $region4: #{highway_mlp_forward.1} parent=1 // pred_region
      _
    $region5: #{highway_mlp_forward.1} parent=1 // pred_fallthru
      _
    // Predicated region
    $region6: #{highway_mlp_forward.1} parent=1 // pred_check
      _
    $region7: #{highway_mlp_forward.1} parent=1 // pred_check_branch
      %20 = sbr.rel (0) target = $region9
    $region8: #{highway_mlp_forward.1} parent=1 // pred_region
      _
    $region9: #{highway_mlp_forward.1} parent=1 // pred_fallthru
      _
    // Predicated region
    $region10: #{highway_mlp_forward.1} parent=1 // pred_check
      _
    $region11: #{highway_mlp_forward.1} parent=1 // pred_check_branch
      %22 = sbr.rel (0) target = $region13
    $region12: #{highway_mlp_forward.1} parent=1 // pred_region
      _
    $region13: #{highway_mlp_forward.1} parent=1 // pred_fallthru
      _
    // Predicated region
    $region14: #{highway_mlp_forward.1} parent=1 // pred_check
      _
    $region15: #{highway_mlp_forward.1} parent=1 // pred_check_branch
      %24 = sbr.rel (0) target = $region17
    $region16: #{highway_mlp_forward.1} parent=1 // pred_region
      %s26 = ssub.s32 4096, 4096
      %27 = vsyncadd [#allocation3], %s26
      %s28 = sshll.u32 [#allocation2], 4
      %s29 = int_to_ptr.vmem [resolvable:$true] %s28
      %34 = dma.hbm_to_vmem [thread:$0]  %s3, 4096, %s29, [#allocation3], 256, 256, 16
    $region17: #{highway_mlp_forward.1} parent=1 // pred_fallthru
      _
    // Predicated region
    $region18: #{highway_mlp_forward.1} parent=1 // pred_check
      _
    $region19: #{highway_mlp_forward.1} parent=1 // pred_check_branch
      %36 = sbr.rel (0) target = $region21
    $region20: #{highway_mlp_forward.1} parent=1 // pred_region
      _
    $region21: #{highway_mlp_forward.1} parent=1 // pred_fallthru
      _
    // Predicated region
    $region22: #{highway_mlp_forward.1} parent=1 // pred_check
      _
    $region23: #{highway_mlp_forward.1} parent=1 // pred_check_branch
      %38 = sbr.rel (0) target = $region25
    $region24: #{highway_mlp_forward.1} parent=1 // pred_region
      %s40 = ssub.s32 4096, 4096
      %41 = vsyncadd [#allocation6], %s40
      %s42 = sshll.u32 [#allocation5], 4
      %s43 = int_to_ptr.vmem [resolvable:$true] %s42
      %48 = dma.hbm_to_vmem [thread:$0]  %s5, 4096, %s43, [#allocation6], 128, 128, 8
    $region25: #{highway_mlp_forward.1} parent=1 // pred_fallthru
      _
    // Predicated region
    $region26: #{highway_mlp_forward.1} parent=1 // pred_check
      _
    $region27: #{highway_mlp_forward.1} parent=1 // pred_check_branch
      %50 = sbr.rel (0) target = $region29
    $region28: #{highway_mlp_forward.1} parent=1 // pred_region
      _
    $region29: #{highway_mlp_forward.1} parent=1 // pred_fallthru
      _
    // Predicated region
    $region30: #{highway_mlp_forward.1} parent=1 // pred_check
      _
    $region31: #{highway_mlp_forward.1} parent=1 // pred_check_branch
      %52 = sbr.rel (0) target = $region33
    $region32: #{highway_mlp_forward.1} parent=1 // pred_region
      _
    $region33: #{highway_mlp_forward.1} parent=1 // pred_fallthru
      _
    // Predicated region
    $region34: #{highway_mlp_forward.1} parent=1 // pred_check
      _
    $region35: #{highway_mlp_forward.1} parent=1 // pred_check_branch
      %54 = sbr.rel (0) target = $region37
    $region36: #{highway_mlp_forward.1} parent=1 // pred_region
      _
    $region37: #{highway_mlp_forward.1} parent=1 // pred_fallthru
      _
    // Predicated region
    $region38: #{highway_mlp_forward.1} parent=1 // pred_check
      _
    $region39: #{highway_mlp_forward.1} parent=1 // pred_check_branch
      %56 = sbr.rel (0) target = $region41
    $region40: #{highway_mlp_forward.1} parent=1 // pred_region
      %57 = dma.done [#allocation3], 4096
    $region41: #{highway_mlp_forward.1} parent=1 // pred_fallthru
      _
    // Predicated region
    $region42: #{highway_mlp_forward.1} parent=1 // pred_check
      _
    $region43: #{highway_mlp_forward.1} parent=1 // pred_check_branch
      %59 = sbr.rel (0) target = $region45
    $region44: #{highway_mlp_forward.1} parent=1 // pred_region
      %60 = dma.done [#allocation6], 4096
    $region45: #{highway_mlp_forward.1} parent=1 // pred_fallthru
      _
    %v61 = vld [vmem:[%s0] sm:$0xff]
    %v62 = vld [vmem:[%s1] sm:$0xff]
    %v63 = vld [vmem:[%s1 + $0x8] sm:$0xff]
    %v64 = vld [vmem:[%s1 + $0x10] sm:$0xff]
    %v65 = vld [vmem:[%s1 + $0x18] sm:$0xff]
    %v66 = vld [vmem:[%s1 + $0x20] sm:$0xff]
    %v67 = vld [vmem:[%s1 + $0x28] sm:$0xff]
    %v68 = vld [vmem:[%s1 + $0x30] sm:$0xff]
    %v69 = vld [vmem:[%s1 + $0x38] sm:$0xff]
    %v70 = vld [vmem:[%s2] sm:$0x1]
    %v72 = vlaneseq
    %v73 = vshrl.u32 %v72, 7
    %v74 = vsub.s32 0, %v73
    %v75 = vrot.slane %v70, %v74
    %vm77 = vcmask 523264
    %v79 = vsel %vm77, %v61, 0
    %81 = vmatprep.subr.mxu0 0.0
    %82 = vmatpush1.msra.mxu0 %v62
    %83 = vmatprep.subr.mxu0 0.0
    %84 = vmatpush1.msra.mxu0 %v63
    %85 = vmatprep.subr.mxu0 0.0
    %86 = vmatpush1.msra.mxu0 %v64
    %87 = vmatprep.subr.mxu0 0.0
    %88 = vmatpush1.msra.mxu0 %v65
    %89 = vmatprep.subr.mxu0 0.0
    %90 = vmatpush1.msra.mxu0 %v66
    %91 = vmatprep.subr.mxu0 0.0
    %92 = vmatpush1.msra.mxu0 %v67
    %93 = vmatprep.subr.mxu0 0.0
    %94 = vmatpush1.msra.mxu0 %v68
    %95 = vmatprep.subr.mxu0 0.0
    %96 = vmatpush1.msra.mxu0 %v69
    %97 = vmatprep.subr.mxu0 0.0
    %98 = vmatpush1.msra.mxu0 0.0
    %99 = vmatprep.subr.mxu0 0.0
    %100 = vmatpush1.msra.mxu0 0.0
    %101 = vmatprep.subr.mxu0 0.0
    %102 = vmatpush1.msra.mxu0 0.0
    %103 = vmatprep.subr.mxu0 0.0
    %104 = vmatpush1.msra.mxu0 0.0
    %105 = vmatprep.subr.mxu0 0.0
    %106 = vmatpush1.msra.mxu0 0.0
    %107 = vmatprep.subr.mxu0 0.0
    %108 = vmatpush1.msra.mxu0 0.0
    %109 = vmatprep.subr.mxu0 0.0
    %110 = vmatpush1.msra.mxu0 0.0
    %111 = vmatprep.subr.mxu0 0.0
    %112 = vmatpush1.msra.mxu0 0.0
    %113 = vmatprep.subr.mxu0 0.0
    %114 = vmatpush1.msra.mxu0 0.0
    %115 = vmatprep.subr.mxu0 0.0
    %116 = vmatpush1.msra.mxu0 0.0
    %117 = vmatprep.subr.mxu0 0.0
    %118 = vmatpush1.msra.mxu0 0.0
    %119 = vmatprep.subr.mxu0 0.0
    %120 = vmatpush1.msra.mxu0 0.0
    %121 = vmatprep.subr.mxu0 0.0
    %122 = vmatpush1.msra.mxu0 0.0
    %123 = vmatprep.subr.mxu0 0.0
    %124 = vmatpush1.msra.mxu0 0.0
    %125 = vmatprep.subr.mxu0 0.0
    %126 = vmatpush1.msra.mxu0 0.0
    %127 = vmatprep.subr.mxu0 0.0
    %128 = vmatpush1.msra.mxu0 0.0
    %129 = vmatprep.subr.mxu0 0.0
    %130 = vmatpush1.msra.mxu0 0.0
    %131 = vmatprep.subr.mxu0 0.0
    %132 = vmatpush1.msra.mxu0 0.0
    %133 = vmatprep.subr.mxu0 0.0
    %134 = vmatpush1.msra.mxu0 0.0
    %135 = vmatprep.subr.mxu0 0.0
    %136 = vmatpush1.msra.mxu0 0.0
    %137 = vmatprep.subr.mxu0 0.0
    %138 = vmatpush1.msra.mxu0 0.0
    %139 = vmatprep.subr.mxu0 0.0
    %140 = vmatpush1.msra.mxu0 0.0
    %141 = vmatprep.subr.mxu0 0.0
    %142 = vmatpush1.msra.mxu0 0.0
    %143 = vmatprep.subr.mxu0 0.0
    %144 = vmatpush1.msra.mxu0 0.0
    %145 = vmatprep.mubr.f32.mxu0 0.0
    %146 = vmatmul.mubr.f32.gmra.mrb[0].mxu0 %v79
    %v147 = vpop.f32.mrb[0].mxu0
    %v148 = vadd.f32 %v75, %v147
    %v149 = vpop.f32.mrb[0].mxu0
    %150 = vdwg.mxu0
    %v151 = vmax.f32 %v148, 0.0
    %v152 = vld [vmem:[#allocation2] sm:$0xff]
    %v153 = vld [vmem:[#allocation2 + $0x8] sm:$0xff]
    %v154 = vld [vmem:[#allocation2 + $0x10] sm:$0xff]
    %v155 = vld [vmem:[#allocation2 + $0x18] sm:$0xff]
    %v156 = vld [vmem:[#allocation2 + $0x20] sm:$0xff]
    %v157 = vld [vmem:[#allocation2 + $0x28] sm:$0xff]
    %v158 = vld [vmem:[#allocation2 + $0x30] sm:$0xff]
    %v159 = vld [vmem:[#allocation2 + $0x38] sm:$0xff]
    %v160 = vld [vmem:[#allocation2 + $0x40] sm:$0xff]
    %v161 = vld [vmem:[#allocation2 + $0x48] sm:$0xff]
    %v162 = vld [vmem:[#allocation2 + $0x50] sm:$0xff]
    %v163 = vld [vmem:[#allocation2 + $0x58] sm:$0xff]
    %v164 = vld [vmem:[#allocation2 + $0x60] sm:$0xff]
    %v165 = vld [vmem:[#allocation2 + $0x68] sm:$0xff]
    %v166 = vld [vmem:[#allocation2 + $0x70] sm:$0xff]
    %v167 = vld [vmem:[#allocation2 + $0x78] sm:$0xff]
    %v168 = vld [vmem:[#allocation2 + $0x80] sm:$0xff]
    %v169 = vld [vmem:[#allocation2 + $0x88] sm:$0xff]
    %v170 = vld [vmem:[#allocation2 + $0x90] sm:$0xff]
    %v171 = vld [vmem:[#allocation2 + $0x98] sm:$0xff]
    %v172 = vld [vmem:[#allocation2 + $0xa0] sm:$0xff]
    %v173 = vld [vmem:[#allocation2 + $0xa8] sm:$0xff]
    %v174 = vld [vmem:[#allocation2 + $0xb0] sm:$0xff]
    %v175 = vld [vmem:[#allocation2 + $0xb8] sm:$0xff]
    %v176 = vld [vmem:[#allocation2 + $0xc0] sm:$0xff]
    %v177 = vld [vmem:[#allocation2 + $0xc8] sm:$0xff]
    %v178 = vld [vmem:[#allocation2 + $0xd0] sm:$0xff]
    %v179 = vld [vmem:[#allocation2 + $0xd8] sm:$0xff]
    %v180 = vld [vmem:[#allocation2 + $0xe0] sm:$0xff]
    %v181 = vld [vmem:[#allocation2 + $0xe8] sm:$0xff]
    %v182 = vld [vmem:[#allocation2 + $0xf0] sm:$0xff]
    %v183 = vld [vmem:[#allocation2 + $0xf8] sm:$0xff]
    %v184 = vld [vmem:[%s4] sm:$0x3]
    %v186 = vlaneseq
    %v187 = vshrl.u32 %v186, 7
    %v188 = vsub.s32 0, %v187
    %v189 = vrot.slane %v184, %v188
    %v190 = vlaneseq
    %v191 = vshrl.u32 %v190, 7
    %v192 = vsub.s32 1, %v191
    %v193 = vrot.slane %v184, %v192
    %196 = vmatprep.subr.mxu0 %v153
    %197 = vmatpush1.msra.mxu0 %v152
    %198 = vmatprep.subr.mxu0 %v155
    %199 = vmatpush1.msra.mxu0 %v154
    %200 = vmatprep.subr.mxu0 %v157
    %201 = vmatpush1.msra.mxu0 %v156
    %202 = vmatprep.subr.mxu0 %v159
    %203 = vmatpush1.msra.mxu0 %v158
    %204 = vmatprep.subr.mxu0 %v161
    %205 = vmatpush1.msra.mxu0 %v160
    %206 = vmatprep.subr.mxu0 %v163
    %207 = vmatpush1.msra.mxu0 %v162
    %208 = vmatprep.subr.mxu0 %v165
    %209 = vmatpush1.msra.mxu0 %v164
    %210 = vmatprep.subr.mxu0 %v167
    %211 = vmatpush1.msra.mxu0 %v166
    %212 = vmatprep.subr.mxu0 %v169
    %213 = vmatpush1.msra.mxu0 %v168
    %214 = vmatprep.subr.mxu0 %v171
    %215 = vmatpush1.msra.mxu0 %v170
    %216 = vmatprep.subr.mxu0 %v173
    %217 = vmatpush1.msra.mxu0 %v172
    %218 = vmatprep.subr.mxu0 %v175
    %219 = vmatpush1.msra.mxu0 %v174
    %220 = vmatprep.subr.mxu0 %v177
    %221 = vmatpush1.msra.mxu0 %v176
    %222 = vmatprep.subr.mxu0 %v179
    %223 = vmatpush1.msra.mxu0 %v178
    %224 = vmatprep.subr.mxu0 %v181
    %225 = vmatpush1.msra.mxu0 %v180
    %226 = vmatprep.subr.mxu0 %v183
    %227 = vmatpush1.msra.mxu0 %v182
    %228 = vmatprep.subr.mxu0 0.0
    %229 = vmatpush1.msra.mxu0 0.0
    %230 = vmatprep.subr.mxu0 0.0
    %231 = vmatpush1.msra.mxu0 0.0
    %232 = vmatprep.subr.mxu0 0.0
    %233 = vmatpush1.msra.mxu0 0.0
    %234 = vmatprep.subr.mxu0 0.0
    %235 = vmatpush1.msra.mxu0 0.0
    %236 = vmatprep.subr.mxu0 0.0
    %237 = vmatpush1.msra.mxu0 0.0
    %238 = vmatprep.subr.mxu0 0.0
    %239 = vmatpush1.msra.mxu0 0.0
    %240 = vmatprep.subr.mxu0 0.0
    %241 = vmatpush1.msra.mxu0 0.0
    %242 = vmatprep.subr.mxu0 0.0
    %243 = vmatpush1.msra.mxu0 0.0
    %244 = vmatprep.subr.mxu0 0.0
    %245 = vmatpush1.msra.mxu0 0.0
    %246 = vmatprep.subr.mxu0 0.0
    %247 = vmatpush1.msra.mxu0 0.0
    %248 = vmatprep.subr.mxu0 0.0
    %249 = vmatpush1.msra.mxu0 0.0
    %250 = vmatprep.subr.mxu0 0.0
    %251 = vmatpush1.msra.mxu0 0.0
    %252 = vmatprep.subr.mxu0 0.0
    %253 = vmatpush1.msra.mxu0 0.0
    %254 = vmatprep.subr.mxu0 0.0
    %255 = vmatpush1.msra.mxu0 0.0
    %256 = vmatprep.subr.mxu0 0.0
    %257 = vmatpush1.msra.mxu0 0.0
    %258 = vmatprep.subr.mxu0 0.0
    %259 = vmatpush1.msra.mxu0 0.0
    %260 = vmatprep.mubr.f32.mxu0 0.0
    %261 = vmatmul.mubr.f32.gmra.mrb[0].mxu0 %v151
    %v262 = vpop.f32.mrb[0].mxu0
    %v263 = vadd.f32 %v189, %v262
    %v264 = vpop.f32.mrb[0].mxu0
    %v265 = vadd.f32 %v193, %v264
    %266 = vdwg.mxu0
    %v267 = vmax.f32 %v263, 0.0
    %v268 = vmax.f32 %v265, 0.0
    %v269 = vld [vmem:[#allocation5] sm:$0xff]
    %v270 = vld [vmem:[#allocation5 + $0x8] sm:$0xff]
    %v271 = vld [vmem:[#allocation5 + $0x10] sm:$0xff]
    %v272 = vld [vmem:[#allocation5 + $0x18] sm:$0xff]
    %v273 = vld [vmem:[#allocation5 + $0x20] sm:$0xff]
    %v274 = vld [vmem:[#allocation5 + $0x28] sm:$0xff]
    %v275 = vld [vmem:[#allocation5 + $0x30] sm:$0xff]
    %v276 = vld [vmem:[#allocation5 + $0x38] sm:$0xff]
    %v277 = vld [vmem:[#allocation5 + $0x40] sm:$0xff]
    %v278 = vld [vmem:[#allocation5 + $0x48] sm:$0xff]
    %v279 = vld [vmem:[#allocation5 + $0x50] sm:$0xff]
    %v280 = vld [vmem:[#allocation5 + $0x58] sm:$0xff]
    %v281 = vld [vmem:[#allocation5 + $0x60] sm:$0xff]
    %v282 = vld [vmem:[#allocation5 + $0x68] sm:$0xff]
    %v283 = vld [vmem:[#allocation5 + $0x70] sm:$0xff]
    %v284 = vld [vmem:[#allocation5 + $0x78] sm:$0xff]
    %v285 = vld [vmem:[#allocation5 + $0x80] sm:$0xff]
    %v286 = vld [vmem:[#allocation5 + $0x88] sm:$0xff]
    %v287 = vld [vmem:[#allocation5 + $0x90] sm:$0xff]
    %v288 = vld [vmem:[#allocation5 + $0x98] sm:$0xff]
    %v289 = vld [vmem:[#allocation5 + $0xa0] sm:$0xff]
    %v290 = vld [vmem:[#allocation5 + $0xa8] sm:$0xff]
    %v291 = vld [vmem:[#allocation5 + $0xb0] sm:$0xff]
    %v292 = vld [vmem:[#allocation5 + $0xb8] sm:$0xff]
    %v293 = vld [vmem:[#allocation5 + $0xc0] sm:$0xff]
    %v294 = vld [vmem:[#allocation5 + $0xc8] sm:$0xff]
    %v295 = vld [vmem:[#allocation5 + $0xd0] sm:$0xff]
    %v296 = vld [vmem:[#allocation5 + $0xd8] sm:$0xff]
    %v297 = vld [vmem:[#allocation5 + $0xe0] sm:$0xff]
    %v298 = vld [vmem:[#allocation5 + $0xe8] sm:$0xff]
    %v299 = vld [vmem:[#allocation5 + $0xf0] sm:$0xff]
    %v300 = vld [vmem:[#allocation5 + $0xf8] sm:$0xff]
    %v301 = vld [vmem:[%s6] sm:$0x1]
    %v303 = vlaneseq
    %v304 = vshrl.u32 %v303, 7
    %v305 = vsub.s32 0, %v304
    %v306 = vrot.slane %v301, %v305
    %308 = vmatprep.subr.mxu0 0.0
    %309 = vmatpush1.msra.mxu0 %v269
    %310 = vmatprep.subr.mxu0 0.0
    %311 = vmatpush1.msra.mxu0 %v270
    %312 = vmatprep.subr.mxu0 0.0
    %313 = vmatpush1.msra.mxu0 %v271
    %314 = vmatprep.subr.mxu0 0.0
    %315 = vmatpush1.msra.mxu0 %v272
    %316 = vmatprep.subr.mxu0 0.0
    %317 = vmatpush1.msra.mxu0 %v273
    %318 = vmatprep.subr.mxu0 0.0
    %319 = vmatpush1.msra.mxu0 %v274
    %320 = vmatprep.subr.mxu0 0.0
    %321 = vmatpush1.msra.mxu0 %v275
    %322 = vmatprep.subr.mxu0 0.0
    %323 = vmatpush1.msra.mxu0 %v276
    %324 = vmatprep.subr.mxu0 0.0
    %325 = vmatpush1.msra.mxu0 %v277
    %326 = vmatprep.subr.mxu0 0.0
    %327 = vmatpush1.msra.mxu0 %v278
    %328 = vmatprep.subr.mxu0 0.0
    %329 = vmatpush1.msra.mxu0 %v279
    %330 = vmatprep.subr.mxu0 0.0
    %331 = vmatpush1.msra.mxu0 %v280
    %332 = vmatprep.subr.mxu0 0.0
    %333 = vmatpush1.msra.mxu0 %v281
    %334 = vmatprep.subr.mxu0 0.0
    %335 = vmatpush1.msra.mxu0 %v282
    %336 = vmatprep.subr.mxu0 0.0
    %337 = vmatpush1.msra.mxu0 %v283
    %338 = vmatprep.subr.mxu0 0.0
    %339 = vmatpush1.msra.mxu0 %v284
    %340 = vmatprep.subr.mxu0 0.0
    %341 = vmatpush1.msra.mxu0 %v285
    %342 = vmatprep.subr.mxu0 0.0
    %343 = vmatpush1.msra.mxu0 %v286
    %344 = vmatprep.subr.mxu0 0.0
    %345 = vmatpush1.msra.mxu0 %v287
    %346 = vmatprep.subr.mxu0 0.0
    %347 = vmatpush1.msra.mxu0 %v288
    %348 = vmatprep.subr.mxu0 0.0
    %349 = vmatpush1.msra.mxu0 %v289
    %350 = vmatprep.subr.mxu0 0.0
    %351 = vmatpush1.msra.mxu0 %v290
    %352 = vmatprep.subr.mxu0 0.0
    %353 = vmatpush1.msra.mxu0 %v291
    %354 = vmatprep.subr.mxu0 0.0
    %355 = vmatpush1.msra.mxu0 %v292
    %356 = vmatprep.subr.mxu0 0.0
    %357 = vmatpush1.msra.mxu0 %v293
    %358 = vmatprep.subr.mxu0 0.0
    %359 = vmatpush1.msra.mxu0 %v294
    %360 = vmatprep.subr.mxu0 0.0
    %361 = vmatpush1.msra.mxu0 %v295
    %362 = vmatprep.subr.mxu0 0.0
    %363 = vmatpush1.msra.mxu0 %v296
    %364 = vmatprep.subr.mxu0 0.0
    %365 = vmatpush1.msra.mxu0 %v297
    %366 = vmatprep.subr.mxu0 0.0
    %367 = vmatpush1.msra.mxu0 %v298
    %368 = vmatprep.subr.mxu0 0.0
    %369 = vmatpush1.msra.mxu0 %v299
    %370 = vmatprep.subr.mxu0 0.0
    %371 = vmatpush1.msra.mxu0 %v300
    %372 = vmatprep.mubr.f32.mxu0 %v268
    %373 = vmatmul.mubr.f32.gmra.mrb[0].mxu0 %v267
    %v374 = vpop.f32.mrb[0].mxu0
    %v375 = vadd.f32 %v306, %v374
    %v376 = vpop.f32.mrb[0].mxu0
    %377 = vdwg.mxu0
    %v378 = vmax.f32 %v375, 0.0
    %v379 = vld [vmem:[%s7] sm:$0xff]
    %v380 = vld [vmem:[%s7 + $0x8] sm:$0xff]
    %v381 = vld [vmem:[%s7 + $0x10] sm:$0xff]
    %v382 = vld [vmem:[%s7 + $0x18] sm:$0xff]
    %v383 = vld [vmem:[%s7 + $0x20] sm:$0xff]
    %v384 = vld [vmem:[%s7 + $0x28] sm:$0xff]
    %v385 = vld [vmem:[%s7 + $0x30] sm:$0xff]
    %v386 = vld [vmem:[%s7 + $0x38] sm:$0xff]
    %v387 = vld [vmem:[%s7 + $0x40] sm:$0xff]
    %v388 = vld [vmem:[%s7 + $0x48] sm:$0xff]
    %v389 = vld [vmem:[%s7 + $0x50] sm:$0xff]
    %v390 = vld [vmem:[%s7 + $0x58] sm:$0xff]
    %v391 = vld [vmem:[%s7 + $0x60] sm:$0xff]
    %v392 = vld [vmem:[%s7 + $0x68] sm:$0xff]
    %v393 = vld [vmem:[%s7 + $0x70] sm:$0xff]
    %v394 = vld [vmem:[%s7 + $0x78] sm:$0xff]
    %v395 = vld [vmem:[%s8] sm:$0x1]
    %v397 = vlaneseq
    %v398 = vshrl.u32 %v397, 7
    %v399 = vsub.s32 0, %v398
    %v400 = vrot.slane %v395, %v399
    %402 = vmatprep.subr.mxu0 0.0
    %403 = vmatpush1.msra.mxu0 %v379
    %404 = vmatprep.subr.mxu0 0.0
    %405 = vmatpush1.msra.mxu0 %v380
    %406 = vmatprep.subr.mxu0 0.0
    %407 = vmatpush1.msra.mxu0 %v381
    %408 = vmatprep.subr.mxu0 0.0
    %409 = vmatpush1.msra.mxu0 %v382
    %410 = vmatprep.subr.mxu0 0.0
    %411 = vmatpush1.msra.mxu0 %v383
    %412 = vmatprep.subr.mxu0 0.0
    %413 = vmatpush1.msra.mxu0 %v384
    %414 = vmatprep.subr.mxu0 0.0
    %415 = vmatpush1.msra.mxu0 %v385
    %416 = vmatprep.subr.mxu0 0.0
    %417 = vmatpush1.msra.mxu0 %v386
    %418 = vmatprep.subr.mxu0 0.0
    %419 = vmatpush1.msra.mxu0 %v387
    %420 = vmatprep.subr.mxu0 0.0
    %421 = vmatpush1.msra.mxu0 %v388
    %422 = vmatprep.subr.mxu0 0.0
    %423 = vmatpush1.msra.mxu0 %v389
    %424 = vmatprep.subr.mxu0 0.0
    %425 = vmatpush1.msra.mxu0 %v390
    %426 = vmatprep.subr.mxu0 0.0
    %427 = vmatpush1.msra.mxu0 %v391
    %428 = vmatprep.subr.mxu0 0.0
    %429 = vmatpush1.msra.mxu0 %v392
    %430 = vmatprep.subr.mxu0 0.0
    %431 = vmatpush1.msra.mxu0 %v393
    %432 = vmatprep.subr.mxu0 0.0
    %433 = vmatpush1.msra.mxu0 %v394
    %434 = vmatprep.subr.mxu0 0.0
    %435 = vmatpush1.msra.mxu0 0.0
    %436 = vmatprep.subr.mxu0 0.0
    %437 = vmatpush1.msra.mxu0 0.0
    %438 = vmatprep.subr.mxu0 0.0
    %439 = vmatpush1.msra.mxu0 0.0
    %440 = vmatprep.subr.mxu0 0.0
    %441 = vmatpush1.msra.mxu0 0.0
    %442 = vmatprep.subr.mxu0 0.0
    %443 = vmatpush1.msra.mxu0 0.0
    %444 = vmatprep.subr.mxu0 0.0
    %445 = vmatpush1.msra.mxu0 0.0
    %446 = vmatprep.subr.mxu0 0.0
    %447 = vmatpush1.msra.mxu0 0.0
    %448 = vmatprep.subr.mxu0 0.0
    %449 = vmatpush1.msra.mxu0 0.0
    %450 = vmatprep.subr.mxu0 0.0
    %451 = vmatpush1.msra.mxu0 0.0
    %452 = vmatprep.subr.mxu0 0.0
    %453 = vmatpush1.msra.mxu0 0.0
    %454 = vmatprep.subr.mxu0 0.0
    %455 = vmatpush1.msra.mxu0 0.0
    %456 = vmatprep.subr.mxu0 0.0
    %457 = vmatpush1.msra.mxu0 0.0
    %458 = vmatprep.subr.mxu0 0.0
    %459 = vmatpush1.msra.mxu0 0.0
    %460 = vmatprep.subr.mxu0 0.0
    %461 = vmatpush1.msra.mxu0 0.0
    %462 = vmatprep.subr.mxu0 0.0
    %463 = vmatpush1.msra.mxu0 0.0
    %464 = vmatprep.subr.mxu0 0.0
    %465 = vmatpush1.msra.mxu0 0.0
    %466 = vmatprep.mubr.f32.mxu0 0.0
    %467 = vmatmul.mubr.f32.gmra.mrb[0].mxu0 %v378
    %v468 = vpop.f32.mrb[0].mxu0
    %v469 = vadd.f32 %v400, %v468
    %v470 = vpop.f32.mrb[0].mxu0
    %471 = vdwg.mxu0
    %vm472 = vcmask 39936
    %473 = vst.msk [vmem:[#allocation7] sm:$0xff] %vm472, %v469
    // Predicated region
    $region46: #{highway_mlp_forward.1} parent=1 // pred_check
      _
    $region47: #{highway_mlp_forward.1} parent=1 // pred_check_branch
      %475 = sbr.rel (0) target = $region49
    $region48: #{highway_mlp_forward.1} parent=1 // pred_region
      %s477 = ssub.s32 128, 128
      %478 = vsyncadd [#allocation4], %s477
      %s480 = sshll.u32 [#allocation7], 4
      %s481 = int_to_ptr.vmem [resolvable:$true] %s480
      %483 = dma.vmem_to_hbm [thread:$0]  %s481, 128, %s9, [#allocation4]
    $region49: #{highway_mlp_forward.1} parent=1 // pred_fallthru
      _
    // Predicated region
    $region50: #{highway_mlp_forward.1} parent=1 // pred_check
      _
    $region51: #{highway_mlp_forward.1} parent=1 // pred_check_branch
      %485 = sbr.rel (0) target = $region53
    $region52: #{highway_mlp_forward.1} parent=1 // pred_region
      %486 = dma.done [#allocation4], 128
    $region53: #{highway_mlp_forward.1} parent=1 // pred_fallthru
      _
    %487 = vsyncpa [#allocation3], 1
    %488 = vsyncpa [#allocation6], 1
    %489 = vsyncpa [#allocation4], 1

</llo_original>
